<compile_context>
chip_gen: v7x
topology: tpu7x:2x2x1
jax: 0.10.0
libtpu: 0.0.40
codegen_flags: <defaults>
</compile_context>

<pallas_src>
import jax
import jax.numpy as jnp
from jax.experimental import pallas as pl
from jax.experimental.pallas import tpu as pltpu


def _round_up(x, m):
    return (x + m - 1) // m * m


def _vmem_capacity_bytes():
    """Per-core physical VMEM; conservative 64 MiB (v7x) fallback."""
    cap = 64 << 20
    try:
        info = pltpu.get_tpu_info()
        cap = int(getattr(info, "vmem_capacity_bytes", cap)) or cap
    except Exception:
        pass
    return cap


def _kernel_vmem_bytes(tj, np_, cp, cqp, attn_bytes):
    """Rough in-kernel VMEM footprint (bytes) for a row tile of size tj."""
    fixed = (2 * cqp * np_ * 2        # q^T block (bf16, double-buffered)
             + 2 * np_ * cp * 2)      # v   block (bf16, double-buffered)
    per_tile = (2 * tj * cqp * 2      # k row tile (bf16)
                + 2 * tj * cp * 4     # x row tile (f32)
                + 2 * tj * cp * 4     # out row tile (f32)
                + 2 * tj * np_ * attn_bytes   # attn row tile (0 if skipped)
                + 3 * tj * np_ * 4)   # st / p / a f32 temporaries
    return fixed + per_tile


def _pick_row_tile(np_, cp, cqp, attn_bytes, budget_bytes):
    """Largest row tile (multiple of 16 dividing Np) that fits the budget."""
    cands = [t for t in range(16, np_ + 1, 16) if np_ % t == 0]
    best = cands[0]
    for t in cands:
        if _kernel_vmem_bytes(t, np_, cp, cqp, attn_bytes) <= budget_bytes:
            best = t
    return best


def _make_kernel(emit_attn, n_valid, n_padded):
    mask_cols = (n_padded != n_valid)

    def kernel(x_ref, qt_ref, k_ref, v_ref, gamma_ref, out_ref, *rest):
        attn_ref = rest[0] if emit_attn else None

        # S^T row tile: st[r, i] = sum_c k[row0+r, c] * q[i, c] == S[i, row0+r].
        # k tile and q^T are both bf16 -> native MXU matmul, f32 accumulation,
        # no per-tile XLU transpose (q was transposed once in the wrapper).
        st = jnp.dot(k_ref[0], qt_ref[0], preferred_element_type=jnp.float32)

        if mask_cols:
            col = jax.lax.broadcasted_iota(jnp.int32, st.shape, 1)
            st = jnp.where(col < n_valid, st, jnp.float32(-1e30))

        # torch softmax(dim=-2) over S == softmax over the last axis of S^T.
        st_max = jnp.max(st, axis=-1, keepdims=True)
        p = jnp.exp(st - st_max)
        # Exact reciprocal (only TJ scalars) so stored attention rows sum to 1.
        inv = 1.0 / jnp.sum(p, axis=-1, keepdims=True)
        a = p * inv                                             # (TJ, Np) f32

        if emit_attn:
            # torch attention_map[b, row0+r, i] == a[r, i].
            attn_ref[0] = a.astype(attn_ref.dtype)

        # o^T row tile: o2[r, c] = sum_i a[r, i] * v[i, c] == o[c, row0+r].
        o2 = jnp.dot(a.astype(jnp.bfloat16), v_ref[0],
                     preferred_element_type=jnp.float32)        # (TJ, Cp)

        out_ref[0] = (x_ref[0] + gamma_ref[0] * o2).astype(out_ref.dtype)

    return kernel


def self_attention_pallas(x_nchw, wq, bq, wk, bk, wv, bv, gamma,
                          return_attention=True, attn_dtype=jnp.bfloat16):
    """SAGAN Self_Attention forward.

    x_nchw: (B, C, H, W) f32; wq/wk: (C//8, C); wv: (C, C); biases 1-D;
    gamma scalar.  Returns (out, attention_map) like the torch module, or
    just `out` when return_attention=False (skips the N^2 HBM writeback).
    attn_dtype defaults to bf16 (halves the dominant attention-map writeback);
    pass jnp.float32 for full torch dtype parity.
    """
    B, C, H, W = x_nchw.shape
    N = H * W
    Cq = wq.shape[0]

    # Lane-dense padding: channels and spatial extent to multiples of 128.
    Cp = _round_up(C, 128)
    Cqp = _round_up(Cq, 128)
    Np = _round_up(N, 128)

    # NCHW -> channels-last (B, Np, Cp), zero padded.
    # TODO(synk): accept channels-last input / emit channels-last output to
    # skip these wrapper transpose passes when the caller's layout allows.
    x_nc = jnp.transpose(x_nchw.reshape(B, C, N), (0, 2, 1)).astype(jnp.float32)
    x_p = jnp.pad(x_nc, ((0, 0), (0, Np - N), (0, Cp - C)))

    # 1x1-conv projections hoisted to plain XLA bf16 matmuls.  Padded weight
    # rows/cols and padded bias entries are zero, so padded q/k channels
    # contribute exactly 0 to S and padded v channels stay 0.  Padded spatial
    # rows only carry bias values; their score columns are masked in-kernel
    # and their output rows are sliced off below.
    f16 = jnp.bfloat16
    wq_p = jnp.zeros((Cp, Cqp), f16).at[:C, :Cq].set(wq.T.astype(f16))
    wk_p = jnp.zeros((Cp, Cqp), f16).at[:C, :Cq].set(wk.T.astype(f16))
    wv_p = jnp.zeros((Cp, Cp), f16).at[:C, :C].set(wv.T.astype(f16))
    bq_p = jnp.zeros((Cqp,), f16).at[:Cq].set(bq.astype(f16))
    bk_p = jnp.zeros((Cqp,), f16).at[:Cq].set(bk.astype(f16))
    bv_p = jnp.zeros((Cp,), f16).at[:C].set(bv.astype(f16))

    xb = x_p.astype(f16)
    q_t = jnp.einsum('bnc,cd->bdn', xb, wq_p) + bq_p[None, :, None]  # (B,Cqp,Np)
    k = jnp.einsum('bnc,cd->bnd', xb, wk_p) + bk_p[None, None, :]    # (B,Np,Cqp)
    v = jnp.einsum('bnc,cd->bnd', xb, wv_p) + bv_p[None, None, :]    # (B,Np,Cp)

    gamma_arr = jnp.asarray(gamma, jnp.float32).reshape(1)

    attn_bytes = jnp.dtype(attn_dtype).itemsize if return_attention else 0
    cap = _vmem_capacity_bytes()
    TJ = _pick_row_tile(Np, Cp, Cqp, attn_bytes, budget_bytes=int(cap * 0.75))
    NJ = Np // TJ

    out_shapes = [jax.ShapeDtypeStruct((B, Np, Cp), jnp.float32)]
    out_specs = [pl.BlockSpec((1, TJ, Cp), lambda b, j: (b, j, 0))]
    if return_attention:
        out_shapes.append(jax.ShapeDtypeStruct((B, Np, Np), attn_dtype))
        out_specs.append(pl.BlockSpec((1, TJ, Np), lambda b, j: (b, j, 0)))

    # Generation-aware scoped-VMEM limit: never above ~90% of physical VMEM
    # (important on v7x's 64 MiB per TensorCore).
    vmem_need = _kernel_vmem_bytes(TJ, Np, Cp, Cqp, attn_bytes)
    vmem_limit = int(min(max(vmem_need + (8 << 20), 32 << 20), int(cap * 0.9)))

    flops = 2 * B * Np * Np * (Cqp + Cp)
    bytes_accessed = (B * Np * Cp * 4 * 2                       # x in + out
                      + B * (2 * Np * Cqp + Np * Cp) * 2        # q_t, k, v (bf16)
                      + (B * Np * Np * attn_bytes if return_attention else 0))

    results = pl.pallas_call(
        _make_kernel(return_attention, N, Np),
        out_shape=tuple(out_shapes),
        grid_spec=pltpu.PrefetchScalarGridSpec(
            num_scalar_prefetch=0,
            grid=(B, NJ),
            in_specs=[
                pl.BlockSpec((1, TJ, Cp), lambda b, j: (b, j, 0)),    # x row tile
                pl.BlockSpec((1, Cqp, Np), lambda b, j: (b, 0, 0)),   # q^T (full)
                pl.BlockSpec((1, TJ, Cqp), lambda b, j: (b, j, 0)),   # k row tile
                pl.BlockSpec((1, Np, Cp), lambda b, j: (b, 0, 0)),    # v (full)
                pl.BlockSpec(memory_space=pltpu.MemorySpace.SMEM),    # gamma
            ],
            out_specs=tuple(out_specs)),
        compiler_params=pltpu.CompilerParams(
            dimension_semantics=("parallel", "parallel"),
            vmem_limit_bytes=vmem_limit),
        cost_estimate=pl.CostEstimate(flops=flops,
                                      transcendentals=B * Np * Np,
                                      bytes_accessed=bytes_accessed),
    )(x_p, q_t, k, v, gamma_arr)

    if return_attention:
        out_p, attn_p = results
    else:
        (out_p,) = results
        attn_p = None

    out = jnp.transpose(out_p[:, :N, :C], (0, 2, 1)).reshape(B, C, H, W)
    if return_attention:
        return out, attn_p[:, :N, :N]
    return out


def self_attention_ref(x_nchw, wq, bq, wk, bk, wv, bv, gamma):
    """Pure-JAX reference matching the torch forward exactly (f32)."""
    B, C, H, W = x_nchw.shape
    N = H * W
    xf = x_nchw.reshape(B, C, N)
    q = jnp.einsum('oc,bcn->bon', wq, xf) + bq[None, :, None]
    k = jnp.einsum('oc,bcn->bon', wk, xf) + bk[None, :, None]
    v = jnp.einsum('oc,bcn->bon', wv, xf) + bv[None, :, None]
    S = jnp.einsum('bci,bcj->bij', q, k)
    A_T = jax.nn.softmax(S, axis=-2)                 # softmax over i (dim=-2)
    attn = jnp.transpose(A_T, (0, 2, 1))
    o = jnp.einsum('bci,bij->bcj', v, A_T)
    out = xf + gamma * o
    return out.reshape(B, C, H, W), attn


if __name__ == "__main__":
    B, C, H, W = 2, 16, 8, 8            # in_dim = 16  ->  C//8 = 2
    Cq = C // 8

    key = jax.random.PRNGKey(0)
    kx, kq, kk, kv, kbq, kbk, kbv = jax.random.split(key, 7)

    x = jax.random.normal(kx, (B, C, H, W), jnp.float32)
    wq = jax.random.normal(kq, (Cq, C), jnp.float32) * 0.1
    wk = jax.random.normal(kk, (Cq, C), jnp.float32) * 0.1
    wv = jax.random.normal(kv, (C, C), jnp.float32) * 0.1
    bq = jax.random.normal(kbq, (Cq,), jnp.float32) * 0.1
    bk = jax.random.normal(kbk, (Cq,), jnp.float32) * 0.1
    bv = jax.random.normal(kbv, (C,), jnp.float32) * 0.1
    # The module initializes gamma = 0; use a nonzero value so the scaled
    # residual path is actually exercised.
    gamma = jnp.float32(0.5)

    out_r, attn_r = self_attention_ref(x, wq, bq, wk, bk, wv, bv, gamma)

    # Default: bf16 attention map (halves the N^2 writeback).
    out, attn = jax.block_until_ready(
        self_attention_pallas(x, wq, bq, wk, bk, wv, bv, gamma))
    assert out.shape == (B, C, H, W) and attn.shape == (B, H * W, H * W)
    assert jnp.allclose(out, out_r, atol=2e-2, rtol=2e-2), \
        float(jnp.max(jnp.abs(out - out_r)))
    assert jnp.allclose(attn.astype(jnp.float32), attn_r, atol=5e-3, rtol=2e-2), \
        float(jnp.max(jnp.abs(attn.astype(jnp.float32) - attn_r)))

    # f32 attention map for callers wanting dtype parity with torch.
    out_f, attn_f = jax.block_until_ready(
        self_attention_pallas(x, wq, bq, wk, bk, wv, bv, gamma,
                              attn_dtype=jnp.float32))
    assert jnp.allclose(attn_f, attn_r, atol=1e-3, rtol=1e-2), \
        float(jnp.max(jnp.abs(attn_f - attn_r)))

    # Variant that skips the N^2 attention-map writeback entirely.
    out_noattn = jax.block_until_ready(
        self_attention_pallas(x, wq, bq, wk, bk, wv, bv, gamma,
                              return_attention=False))
    assert jnp.allclose(out_noattn, out_r, atol=2e-2, rtol=2e-2)

    print("KERNEL_OK")
</pallas_src>

<mosaic_0001>
module attributes {stable_mosaic.version = 11 : i64} {
  func.func @kernel(%arg0: i32, %arg1: i32, %arg2: memref<1x128x128xf32, #tpu.memory_space<vmem>>, %arg3: memref<1x128x128xbf16, #tpu.memory_space<vmem>>, %arg4: memref<1x128x128xbf16, #tpu.memory_space<vmem>>, %arg5: memref<1x128x128xbf16, #tpu.memory_space<vmem>>, %arg6: memref<1xf32, #tpu.memory_space<smem>>, %arg7: memref<1x128x128xf32, #tpu.memory_space<vmem>>, %arg8: memref<1x128x128xbf16, #tpu.memory_space<vmem>>) attributes {dimension_semantics = [#tpu.dimension_semantics<parallel>, #tpu.dimension_semantics<parallel>], iteration_bounds = array<i64: 2, 1>, scalar_prefetch = 0 : i64, scratch_operands = 0 : i64, tpu.core_type = #tpu.core_type<tc>, window_params = [{transform_indices = @transform_0, window_bounds = array<i64: 1, 128, 128>}, {transform_indices = @transform_1, window_bounds = array<i64: 1, 128, 128>}, {transform_indices = @transform_2, window_bounds = array<i64: 1, 128, 128>}, {transform_indices = @transform_3, window_bounds = array<i64: 1, 128, 128>}, {transform_indices = @transform_4, window_bounds = array<i64: 1>}, {transform_indices = @transform_5, window_bounds = array<i64: 1, 128, 128>}, {transform_indices = @transform_6, window_bounds = array<i64: 1, 128, 128>}]} {
    %c0 = arith.constant 0 : index
    %c0_0 = arith.constant 0 : index
    %c0_1 = arith.constant 0 : index
    %0 = vector.load %arg4[%c0, %c0_0, %c0_1] : memref<1x128x128xbf16, #tpu.memory_space<vmem>>, vector<1x128x128xbf16>
    %1 = vector.shape_cast %0 : vector<1x128x128xbf16> to vector<128x128xbf16>
    %c0_2 = arith.constant 0 : index
    %c0_3 = arith.constant 0 : index
    %c0_4 = arith.constant 0 : index
    %2 = vector.load %arg3[%c0_2, %c0_3, %c0_4] : memref<1x128x128xbf16, #tpu.memory_space<vmem>>, vector<1x128x128xbf16>
    %3 = vector.shape_cast %2 : vector<1x128x128xbf16> to vector<128x128xbf16>
    %cst = arith.constant dense<0.000000e+00> : vector<128x128xf32>
    %4 = tpu.matmul %1, %3, %cst {dimension_numbers = #tpu.dot_dimension_numbers<[1], [0], [0], [1], [0, 0, 1, 1], [], []>} : vector<128x128xbf16>, vector<128x128xbf16>, vector<128x128xf32> -> vector<128x128xf32>
    %5 = tpu.iota {dimensions = array<i32: 1>} : vector<128x128xi32>
    %c64_i32 = arith.constant 64 : i32
    %6 = vector.broadcast %c64_i32 : i32 to vector<128x128xi32>
    %7 = arith.cmpi slt, %5, %6 : vector<128x128xi32>
    %cst_5 = arith.constant -1.000000e+30 : f32
    %8 = vector.broadcast %cst_5 : f32 to vector<128x128xf32>
    %9 = arith.select %7, %4, %8 : vector<128x128xi1>, vector<128x128xf32>
    %cst_6 = arith.constant dense<0xFF800000> : vector<128xf32>
    %10 = vector.multi_reduction <maximumf>, %9, %cst_6 [1] : vector<128x128xf32> to vector<128xf32>
    %11 = vector.shape_cast %10 : vector<128xf32> to vector<128x1xf32>
    %12 = vector.broadcast %11 : vector<128x1xf32> to vector<128x128xf32>
    %13 = arith.subf %9, %12 : vector<128x128xf32>
    %14 = math.exp %13 : vector<128x128xf32>
    %cst_7 = arith.constant dense<0.000000e+00> : vector<128xf32>
    %15 = vector.multi_reduction <add>, %14, %cst_7 [1] : vector<128x128xf32> to vector<128xf32>
    %16 = vector.shape_cast %15 : vector<128xf32> to vector<128x1xf32>
    %cst_8 = arith.constant 1.000000e+00 : f32
    %17 = vector.broadcast %cst_8 : f32 to vector<128x1xf32>
    %18 = arith.divf %17, %16 : vector<128x1xf32>
    %19 = vector.broadcast %18 : vector<128x1xf32> to vector<128x128xf32>
    %20 = arith.mulf %14, %19 : vector<128x128xf32>
    %21 = arith.truncf %20 : vector<128x128xf32> to vector<128x128xbf16>
    %c0_9 = arith.constant 0 : index
    %c0_10 = arith.constant 0 : index
    %c0_11 = arith.constant 0 : index
    %22 = vector.load %arg8[%c0_9, %c0_10, %c0_11] : memref<1x128x128xbf16, #tpu.memory_space<vmem>>, vector<1x128x128xbf16>
    %23 = vector.shape_cast %22 : vector<1x128x128xbf16> to vector<128x128xbf16>
    %24 = vector.shape_cast %21 : vector<128x128xbf16> to vector<1x128x128xbf16>
    tpu.vector_store %arg8[%c0_9, %c0_10, %c0_11], %24 {strides = array<i32>} : memref<1x128x128xbf16, #tpu.memory_space<vmem>>, vector<1x128x128xbf16>,
    %25 = arith.truncf %20 : vector<128x128xf32> to vector<128x128xbf16>
    %c0_12 = arith.constant 0 : index
    %c0_13 = arith.constant 0 : index
    %c0_14 = arith.constant 0 : index
    %26 = vector.load %arg5[%c0_12, %c0_13, %c0_14] : memref<1x128x128xbf16, #tpu.memory_space<vmem>>, vector<1x128x128xbf16>
    %27 = vector.shape_cast %26 : vector<1x128x128xbf16> to vector<128x128xbf16>
    %cst_15 = arith.constant dense<0.000000e+00> : vector<128x128xf32>
    %28 = tpu.matmul %25, %27, %cst_15 {dimension_numbers = #tpu.dot_dimension_numbers<[1], [0], [0], [1], [0, 0, 1, 1], [], []>} : vector<128x128xbf16>, vector<128x128xbf16>, vector<128x128xf32> -> vector<128x128xf32>
    %c0_16 = arith.constant 0 : index
    %c0_17 = arith.constant 0 : index
    %c0_18 = arith.constant 0 : index
    %29 = vector.load %arg2[%c0_16, %c0_17, %c0_18] : memref<1x128x128xf32, #tpu.memory_space<vmem>>, vector<1x128x128xf32>
    %30 = vector.shape_cast %29 : vector<1x128x128xf32> to vector<128x128xf32>
    %c0_19 = arith.constant 0 : index
    %31 = memref.load %arg6[%c0_19] : memref<1xf32, #tpu.memory_space<smem>>
    %32 = vector.broadcast %31 : f32 to vector<128x128xf32>
    %33 = arith.mulf %32, %28 : vector<128x128xf32>
    %34 = arith.addf %30, %33 : vector<128x128xf32>
    %c0_20 = arith.constant 0 : index
    %c0_21 = arith.constant 0 : index
    %c0_22 = arith.constant 0 : index
    %35 = vector.load %arg7[%c0_20, %c0_21, %c0_22] : memref<1x128x128xf32, #tpu.memory_space<vmem>>, vector<1x128x128xf32>
    %36 = vector.shape_cast %35 : vector<1x128x128xf32> to vector<128x128xf32>
    %37 = vector.shape_cast %34 : vector<128x128xf32> to vector<1x128x128xf32>
    tpu.vector_store %arg7[%c0_20, %c0_21, %c0_22], %37 {strides = array<i32>} : memref<1x128x128xf32, #tpu.memory_space<vmem>>, vector<1x128x128xf32>,
    return
  }
  func.func @transform_0(%arg0: i32, %arg1: i32) -> (i32, i32, i32) {
    %c0_i32 = arith.constant 0 : i32
    %c0_i32_0 = arith.constant 0 : i32
    return %arg0, %arg1, %c0_i32 : i32, i32, i32
  }
  func.func @transform_1(%arg0: i32, %arg1: i32) -> (i32, i32, i32) {
    %c0_i32 = arith.constant 0 : i32
    %c0_i32_0 = arith.constant 0 : i32
    %c0_i32_1 = arith.constant 0 : i32
    return %arg0, %c0_i32, %c0_i32_0 : i32, i32, i32
  }
  func.func @transform_2(%arg0: i32, %arg1: i32) -> (i32, i32, i32) {
    %c0_i32 = arith.constant 0 : i32
    %c0_i32_0 = arith.constant 0 : i32
    return %arg0, %arg1, %c0_i32 : i32, i32, i32
  }
  func.func @transform_3(%arg0: i32, %arg1: i32) -> (i32, i32, i32) {
    %c0_i32 = arith.constant 0 : i32
    %c0_i32_0 = arith.constant 0 : i32
    %c0_i32_1 = arith.constant 0 : i32
    return %arg0, %c0_i32, %c0_i32_0 : i32, i32, i32
  }
  func.func @transform_4(%arg0: i32, %arg1: i32) -> i32 {
    %c0_i32 = arith.constant 0 : i32
    %c0_i32_0 = arith.constant 0 : i32
    return %c0_i32 : i32
  }
  func.func @transform_5(%arg0: i32, %arg1: i32) -> (i32, i32, i32) {
    %c0_i32 = arith.constant 0 : i32
    %c0_i32_0 = arith.constant 0 : i32
    return %arg0, %arg1, %c0_i32 : i32, i32, i32
  }
  func.func @transform_6(%arg0: i32, %arg1: i32) -> (i32, i32, i32) {
    %c0_i32 = arith.constant 0 : i32
    %c0_i32_0 = arith.constant 0 : i32
    return %arg0, %arg1, %c0_i32 : i32, i32, i32
  }
}

</mosaic_0001>

<llo_original>
// kernel: tpu_custom_call.1
$region0: #{tpu_custom_call.1}
  #allocation0 [shape = 'u32[]', space=smem, size = 0x4, offset = 0x4, fixed_abs, tag = 'smem constant byte address 0x4 - core index']
  #allocation1 [shape = 'u32[144,128]{1,0:T(1,128)}', space=vmem, size = 0x12000, scoped, tag = 'internal scratch']
  #allocation2 [shape = 'f32[1]{0:T(128)S(6)}', space=smem, size = 0x200, scoped, tag = 'scoped memory for tpu_custom_call.1']
  %s0 = inlined_call_operand.hbm [shape: f32[2,128,128], index: 0, kind: input, shape index: {}]
  %s1 = inlined_call_operand.hbm [shape: bf16[2,128,128], index: 1, kind: input, shape index: {}]
  %s2 = inlined_call_operand.hbm [shape: bf16[2,128,128], index: 2, kind: input, shape index: {}]
  %s3 = inlined_call_operand.hbm [shape: bf16[2,128,128], index: 3, kind: input, shape index: {}]
  %s4 = inlined_call_operand.<no memory space> [shape: f32[1], index: 4, kind: input, shape index: {}]
  %s5 = inlined_call_operand.hbm [shape: f32[2,128,128], index: 5, kind: output, shape index: {0}]
  %s6 = inlined_call_operand.hbm [shape: bf16[2,128,128], index: 6, kind: output, shape index: {1}]
  %7 = xla_tuple %s5, %s6
  %s8 = sld [smem:[#allocation0]]
  $region77: #{tpu_custom_call.1} parent=0
    _
  %s10 = ssub.s32 1, %s8
  %s11 = scalar_select 0, %s10, %s8
  %12 = sst [smem:[#allocation2]] %s4
  $region1: #{tpu_custom_call.1} parent=0
    #allocation3 [shape = 'u8[131072]{0}', space=vmem, size = 0x20000, scoped, tag = 'input window, operand 0']
    #allocation4 [shape = 's32[2]{0}', space=sflag, size = 0x8, scoped, tag = 'scoped memory for tpu_custom_call.1']
    #allocation5 [shape = 's32[2]{0}', space=sflag, size = 0x8, scoped, tag = 'scoped memory for tpu_custom_call.1']
    #allocation6 [shape = 'u8[65536]{0}', space=vmem, size = 0x10000, scoped, tag = 'input window, operand 1']
    #allocation7 [shape = 's32[2]{0}', space=sflag, size = 0x8, scoped, tag = 'scoped memory for tpu_custom_call.1']
    #allocation8 [shape = 'u8[65536]{0}', space=vmem, size = 0x10000, scoped, tag = 'input window, operand 2']
    #allocation9 [shape = 'u8[65536]{0}', space=vmem, size = 0x10000, scoped, tag = 'input window, operand 3']
    #allocation10 [shape = 's32[2]{0}', space=sflag, size = 0x8, scoped, tag = 'scoped memory for tpu_custom_call.1']
    #allocation11 [shape = 'u8[131072]{0}', space=vmem, size = 0x20000, scoped, tag = 'output window, operand 0']
    #allocation12 [shape = 'u8[65536]{0}', space=vmem, size = 0x10000, scoped, tag = 'output window, operand 1']
    #allocation13 [shape = 's32[2]{0}', space=sflag, size = 0x8, scoped, tag = 'scoped memory for tpu_custom_call.1']
    %13 = vsyncpa [#allocation4], 0
    %s14 = scalar_lea.sflag [#allocation4], 1
    %15 = vsyncpa %s14, 0
    %16 = vsyncpa [#allocation7], 0
    %s17 = scalar_lea.sflag [#allocation7], 1
    %18 = vsyncpa %s17, 0
    %19 = vsyncpa [#allocation10], 0
    %s20 = scalar_lea.sflag [#allocation10], 1
    %21 = vsyncpa %s20, 0
    %22 = vsyncpa [#allocation5], 0
    %s23 = scalar_lea.sflag [#allocation5], 1
    %24 = vsyncpa %s23, 0
    %25 = vsyncpa [#allocation13], 0
    %s26 = scalar_lea.sflag [#allocation13], 1
    %27 = vsyncpa %s26, 0
    loop: start=0, step=1, limit=4
    $region2: #{tpu_custom_call.1} parent=1 // loop_pre_header
      _
    $region3: #{tpu_custom_call.1} parent=1 // loop_header
      %s29 = sphi 0, %s33
      %p30 = scmp.ge.s32.totalorder %s29, 4
      %s36 = sphi 0, %s48
      %s37 = sphi 0, %s44
      %s38 = sphi 0, %s36
      %s39 = sphi 0, %s37
      %s40 = sphi 0, %s38
      %s41 = sphi 0, %s39
      %s53 = sphi 0, %s55
      %s56 = sphi 0, %s53
      %s57 = sphi 0, %s56
      %s73 = sphi 0, %s57
      %s79 = sphi 0, %s81
      %s82 = sphi 0, %s79
      %s83 = sphi 0, %s82
      %s99 = sphi 0, %s83
      %s107 = sphi 0, %s109
      %s110 = sphi 0, %s107
      %s111 = sphi 0, %s110
      %s127 = sphi 0, %s111
      %s133 = sphi 0, %s135
      %s136 = sphi 0, %s133
      %s137 = sphi 0, %s136
      %s153 = sphi 0, %s137
      %s157 = sphi 0, %s157
      %s159 = sphi 0, %s157
      %s160 = sphi 0, %s159
      %s174 = sphi 0, %s160
      %s182 = sphi 0, %s184
      %s185 = sphi 0, %s182
      %s186 = sphi 0, %s185
      %s202 = sphi 0, %s186
      %s210 = sphi 0, %s212
      %s213 = sphi 0, %s210
      %s214 = sphi 0, %s213
      %s230 = sphi 0, %s214
    $region4: #{tpu_custom_call.1} parent=1 // loop_header_branch
      %32 = sbr.rel (%p30) target = $region8
    $region5: #{tpu_custom_call.1} parent=1 // loop_body
      %s34 = ssub.s32 %s29, 1
      %s35 = ssub.s32 %s29, 2
      %s42 = sadd.s32 1, %s37
      %p43 = scmp.ge.s32.totalorder %s42, 1
      %s44 = scalar_select %p43, 0, %s42
      %s45 = sadd.s32 1, %s36
      %s46 = scalar_select %p43, %s45, %s36
      %p47 = scmp.ge.s32.totalorder %s46, 2
      %s48 = scalar_select %p47, 0, %s46
      %s49 = ssub.s32 %s36, %s48
      %s50 = ssub.s32 %s37, %s44
      %s51 = sor.u32 %s49, %s50
      %p52 = scmp.eq.s32.totalorder %s51, 0
      %s54 = sadd.s32 %s53, 1
      %s55 = scalar_select %p52, %s53, %s54
      %p58 = pneg %p52
      %p59 = scmp.eq.s32.totalorder %s29, 1
      %p60 = por %p58, %p59
      %p61 = scmp.ne.s32.totalorder %s53, %s56
      %p62 = scmp.eq.s32.totalorder %s29, 0
      %p63 = por %p61, %p62
      %p64 = scmp.ne.s32.totalorder %s53, %s56
      %p65 = scmp.eq.s32.totalorder %s34, 1
      %p66 = por %p64, %p65
      %p67 = scmp.ne.s32.totalorder %s56, %s57
      %p68 = scmp.eq.s32.totalorder %s34, 0
      %p69 = por %p67, %p68
      %p70 = scmp.ne.s32.totalorder %s56, %s57
      %p71 = scmp.eq.s32.totalorder %s35, 1
      %p72 = por %p70, %p71
      %p74 = scmp.ne.s32.totalorder %s57, %s73
      %p75 = scmp.eq.s32.totalorder %s35, 0
      %p76 = por %p74, %p75
      %s77 = ssub.s32 %s36, %s48
      %p78 = scmp.eq.s32.totalorder %s77, 0
      %s80 = sadd.s32 %s79, 1
      %s81 = scalar_select %p78, %s79, %s80
      %p84 = pneg %p78
      %p85 = scmp.eq.s32.totalorder %s29, 1
      %p86 = por %p84, %p85
      %p87 = scmp.ne.s32.totalorder %s79, %s82
      %p88 = scmp.eq.s32.totalorder %s29, 0
      %p89 = por %p87, %p88
      %p90 = scmp.ne.s32.totalorder %s79, %s82
      %p91 = scmp.eq.s32.totalorder %s34, 1
      %p92 = por %p90, %p91
      %p93 = scmp.ne.s32.totalorder %s82, %s83
      %p94 = scmp.eq.s32.totalorder %s34, 0
      %p95 = por %p93, %p94
      %p96 = scmp.ne.s32.totalorder %s82, %s83
      %p97 = scmp.eq.s32.totalorder %s35, 1
      %p98 = por %p96, %p97
      %p100 = scmp.ne.s32.totalorder %s83, %s99
      %p101 = scmp.eq.s32.totalorder %s35, 0
      %p102 = por %p100, %p101
      %s103 = ssub.s32 %s36, %s48
      %s104 = ssub.s32 %s37, %s44
      %s105 = sor.u32 %s103, %s104
      %p106 = scmp.eq.s32.totalorder %s105, 0
      %s108 = sadd.s32 %s107, 1
      %s109 = scalar_select %p106, %s107, %s108
      %p112 = pneg %p106
      %p113 = scmp.eq.s32.totalorder %s29, 1
      %p114 = por %p112, %p113
      %p115 = scmp.ne.s32.totalorder %s107, %s110
      %p116 = scmp.eq.s32.totalorder %s29, 0
      %p117 = por %p115, %p116
      %p118 = scmp.ne.s32.totalorder %s107, %s110
      %p119 = scmp.eq.s32.totalorder %s34, 1
      %p120 = por %p118, %p119
      %p121 = scmp.ne.s32.totalorder %s110, %s111
      %p122 = scmp.eq.s32.totalorder %s34, 0
      %p123 = por %p121, %p122
      %p124 = scmp.ne.s32.totalorder %s110, %s111
      %p125 = scmp.eq.s32.totalorder %s35, 1
      %p126 = por %p124, %p125
      %p128 = scmp.ne.s32.totalorder %s111, %s127
      %p129 = scmp.eq.s32.totalorder %s35, 0
      %p130 = por %p128, %p129
      %s131 = ssub.s32 %s36, %s48
      %p132 = scmp.eq.s32.totalorder %s131, 0
      %s134 = sadd.s32 %s133, 1
      %s135 = scalar_select %p132, %s133, %s134
      %p138 = pneg %p132
      %p139 = scmp.eq.s32.totalorder %s29, 1
      %p140 = por %p138, %p139
      %p141 = scmp.ne.s32.totalorder %s133, %s136
      %p142 = scmp.eq.s32.totalorder %s29, 0
      %p143 = por %p141, %p142
      %p144 = scmp.ne.s32.totalorder %s133, %s136
      %p145 = scmp.eq.s32.totalorder %s34, 1
      %p146 = por %p144, %p145
      %p147 = scmp.ne.s32.totalorder %s136, %s137
      %p148 = scmp.eq.s32.totalorder %s34, 0
      %p149 = por %p147, %p148
      %p150 = scmp.ne.s32.totalorder %s136, %s137
      %p151 = scmp.eq.s32.totalorder %s35, 1
      %p152 = por %p150, %p151
      %p154 = scmp.ne.s32.totalorder %s137, %s153
      %p155 = scmp.eq.s32.totalorder %s35, 0
      %p156 = por %p154, %p155
      %s158 = sadd.s32 %s157, 1
      %p161 = scmp.eq.s32.totalorder %s29, 1
      %p162 = scmp.ne.s32.totalorder %s157, %s159
      %p163 = scmp.eq.s32.totalorder %s29, 0
      %p164 = por %p162, %p163
      %p165 = scmp.ne.s32.totalorder %s157, %s159
      %p166 = scmp.eq.s32.totalorder %s34, 1
      %p167 = por %p165, %p166
      %p168 = scmp.ne.s32.totalorder %s159, %s160
      %p169 = scmp.eq.s32.totalorder %s34, 0
      %p170 = por %p168, %p169
      %p171 = scmp.ne.s32.totalorder %s159, %s160
      %p172 = scmp.eq.s32.totalorder %s35, 1
      %p173 = por %p171, %p172
      %p175 = scmp.ne.s32.totalorder %s160, %s174
      %p176 = scmp.eq.s32.totalorder %s35, 0
      %p177 = por %p175, %p176
      %s178 = ssub.s32 %s36, %s48
      %s179 = ssub.s32 %s37, %s44
      %s180 = sor.u32 %s178, %s179
      %p181 = scmp.eq.s32.totalorder %s180, 0
      %s183 = sadd.s32 %s182, 1
      %s184 = scalar_select %p181, %s182, %s183
      %p187 = pneg %p181
      %p188 = scmp.eq.s32.totalorder %s29, 1
      %p189 = por %p187, %p188
      %p190 = scmp.ne.s32.totalorder %s182, %s185
      %p191 = scmp.eq.s32.totalorder %s29, 0
      %p192 = por %p190, %p191
      %p193 = scmp.ne.s32.totalorder %s182, %s185
      %p194 = scmp.eq.s32.totalorder %s34, 1
      %p195 = por %p193, %p194
      %p196 = scmp.ne.s32.totalorder %s185, %s186
      %p197 = scmp.eq.s32.totalorder %s34, 0
      %p198 = por %p196, %p197
      %p199 = scmp.ne.s32.totalorder %s185, %s186
      %p200 = scmp.eq.s32.totalorder %s35, 1
      %p201 = por %p199, %p200
      %p203 = scmp.ne.s32.totalorder %s186, %s202
      %p204 = scmp.eq.s32.totalorder %s35, 0
      %p205 = por %p203, %p204
      %s206 = ssub.s32 %s36, %s48
      %s207 = ssub.s32 %s37, %s44
      %s208 = sor.u32 %s206, %s207
      %p209 = scmp.eq.s32.totalorder %s208, 0
      %s211 = sadd.s32 %s210, 1
      %s212 = scalar_select %p209, %s210, %s211
      %p215 = pneg %p209
      %p216 = scmp.eq.s32.totalorder %s29, 1
      %p217 = por %p215, %p216
      %p218 = scmp.ne.s32.totalorder %s210, %s213
      %p219 = scmp.eq.s32.totalorder %s29, 0
      %p220 = por %p218, %p219
      %p221 = scmp.ne.s32.totalorder %s210, %s213
      %p222 = scmp.eq.s32.totalorder %s34, 1
      %p223 = por %p221, %p222
      %p224 = scmp.ne.s32.totalorder %s213, %s214
      %p225 = scmp.eq.s32.totalorder %s34, 0
      %p226 = por %p224, %p225
      %p227 = scmp.ne.s32.totalorder %s213, %s214
      %p228 = scmp.eq.s32.totalorder %s35, 1
      %p229 = por %p227, %p228
      %p231 = scmp.ne.s32.totalorder %s214, %s230
      %p232 = scmp.eq.s32.totalorder %s35, 0
      %p233 = por %p231, %p232
      %p234 = scmp.le.s32.totalorder 1, %s29
      %p235 = scmp.lt.s32.totalorder %s29, 3
      %p236 = pnand %p234, %p235
      %p237 = pneg %p236
      // Predicated region
      $region9: #{tpu_custom_call.1} parent=5 // pred_check
        _
      $region10: #{tpu_custom_call.1} parent=5 // pred_check_branch
        %239 = sbr.rel (%p236) target = $region12
      $region11: #{tpu_custom_call.1} parent=5 // pred_region
        %s240 = ssub.s32 %s29, 1
        // Predicated region
        $region13: #{tpu_custom_call.1} parent=11 // pred_check
          %p241 = pneg %p170
        $region14: #{tpu_custom_call.1} parent=11 // pred_check_branch
          %243 = sbr.rel (%p241) target = $region16
        $region15: #{tpu_custom_call.1} parent=11 // pred_region
          _
        $region16: #{tpu_custom_call.1} parent=11 // pred_fallthru
          _
      $region12: #{tpu_custom_call.1} parent=5 // pred_fallthru
        _
      %p244 = scmp.lt.s32.totalorder %s29, 2
      // Predicated region
      $region17: #{tpu_custom_call.1} parent=5 // pred_check
        %p245 = pneg %p244
      $region18: #{tpu_custom_call.1} parent=5 // pred_check_branch
        %247 = sbr.rel (%p245) target = $region20
      $region19: #{tpu_custom_call.1} parent=5 // pred_region
        // Predicated region
        $region21: #{tpu_custom_call.1} parent=19 // pred_check
          %p248 = pneg %p63
        $region22: #{tpu_custom_call.1} parent=19 // pred_check_branch
          %250 = sbr.rel (%p248) target = $region24
        $region23: #{tpu_custom_call.1} parent=19 // pred_region
          %s251 = sand.u32 %s53, 1
          %s252 = scalar_lea.sflag [#allocation4], %s251
          %s253 = sand.u32 %s53, 1
          %s254 = smul.addr %s253, 128
          %s255 = scalar_lea.vmem [#allocation3], %s254
          %s256 = smul.u32 16, %s37
          %s258 = ssub.s32 2048, 2048
          %259 = vsyncadd %s252, %s258
          %s260 = smul.addr %s36, 16
          %s261 = sadd.s32 %s256, %s260
          %s262 = smul.addr %s261, 128
          %s263 = scalar_lea.hbm %s0, %s262
          %s264 = sshll.u32 %s255, 4
          %s265 = int_to_ptr.vmem [resolvable:$true] %s264
          %270 = dma.hbm_to_vmem [thread:$0]  %s263, 2048, %s265, %s252, 128, 128, 8
        $region24: #{tpu_custom_call.1} parent=19 // pred_fallthru
          _
        // Predicated region
        $region25: #{tpu_custom_call.1} parent=19 // pred_check
          %p271 = pneg %p89
        $region26: #{tpu_custom_call.1} parent=19 // pred_check_branch
          %273 = sbr.rel (%p271) target = $region28
        $region27: #{tpu_custom_call.1} parent=19 // pred_region
          %s274 = sand.u32 %s29, 1
          %s275 = scalar_lea.sflag [#allocation7], %s274
          %s276 = sand.u32 %s79, 1
          %s277 = smul.addr %s276, 64
          %s278 = scalar_lea.vmem [#allocation6], %s277
          %s280 = ssub.s32 1024, 1024
          %281 = vsyncadd %s275, %s280
          %s282 = smul.addr %s36, 16
          %s283 = smul.addr %s282, 64
          %s284 = scalar_lea.hbm %s1, %s283
          %s285 = sshll.u32 %s278, 4
          %s286 = int_to_ptr.vmem [resolvable:$true] %s285
          %291 = dma.hbm_to_vmem [thread:$0]  %s284, 1024, %s286, %s275, 64, 64, 4
        $region28: #{tpu_custom_call.1} parent=19 // pred_fallthru
          _
        // Predicated region
        $region29: #{tpu_custom_call.1} parent=19 // pred_check
          %p292 = pneg %p117
        $region30: #{tpu_custom_call.1} parent=19 // pred_check_branch
          %294 = sbr.rel (%p292) target = $region32
        $region31: #{tpu_custom_call.1} parent=19 // pred_region
          %s295 = sand.u32 %s29, 1
          %s296 = scalar_lea.sflag [#allocation7], %s295
          %s297 = sand.u32 %s107, 1
          %s298 = smul.addr %s297, 64
          %s299 = scalar_lea.vmem [#allocation8], %s298
          %s300 = smul.u32 16, %s37
          %s302 = ssub.s32 1024, 1024
          %303 = vsyncadd %s296, %s302
          %s304 = smul.addr %s36, 16
          %s305 = sadd.s32 %s300, %s304
          %s306 = smul.addr %s305, 64
          %s307 = scalar_lea.hbm %s2, %s306
          %s308 = sshll.u32 %s299, 4
          %s309 = int_to_ptr.vmem [resolvable:$true] %s308
          %314 = dma.hbm_to_vmem [thread:$0]  %s307, 1024, %s309, %s296, 64, 64, 4
        $region32: #{tpu_custom_call.1} parent=19 // pred_fallthru
          _
        // Predicated region
        $region33: #{tpu_custom_call.1} parent=19 // pred_check
          %p315 = pneg %p143
        $region34: #{tpu_custom_call.1} parent=19 // pred_check_branch
          %317 = sbr.rel (%p315) target = $region36
        $region35: #{tpu_custom_call.1} parent=19 // pred_region
          %s318 = sand.u32 %s133, 1
          %s319 = scalar_lea.sflag [#allocation10], %s318
          %s320 = sand.u32 %s133, 1
          %s321 = smul.addr %s320, 64
          %s322 = scalar_lea.vmem [#allocation9], %s321
          %s324 = ssub.s32 1024, 1024
          %325 = vsyncadd %s319, %s324
          %s326 = smul.addr %s36, 16
          %s327 = smul.addr %s326, 64
          %s328 = scalar_lea.hbm %s3, %s327
          %s329 = sshll.u32 %s322, 4
          %s330 = int_to_ptr.vmem [resolvable:$true] %s329
          %335 = dma.hbm_to_vmem [thread:$0]  %s328, 1024, %s330, %s319, 64, 64, 4
        $region36: #{tpu_custom_call.1} parent=19 // pred_fallthru
          _
      $region20: #{tpu_custom_call.1} parent=5 // pred_fallthru
        _
      %p336 = scmp.le.s32.totalorder 1, %s29
      %p337 = scmp.lt.s32.totalorder %s29, 3
      %p338 = pnand %p336, %p337
      %p339 = pneg %p338
      // Predicated region
      $region37: #{tpu_custom_call.1} parent=5 // pred_check
        _
      $region38: #{tpu_custom_call.1} parent=5 // pred_check_branch
        %341 = sbr.rel (%p338) target = $region40
      $region39: #{tpu_custom_call.1} parent=5 // pred_region
        %s342 = ssub.s32 %s29, 1
        %s343 = sand.u32 %s56, 1
        %s344 = scalar_lea.sflag [#allocation4], %s343
        %s345 = sand.u32 %s56, 1
        %s346 = smul.addr %s345, 128
        %s347 = scalar_lea.vmem [#allocation3], %s346
        // Predicated region
        $region41: #{tpu_custom_call.1} parent=39 // pred_check
          %p348 = pneg %p69
        $region42: #{tpu_custom_call.1} parent=39 // pred_check_branch
          %350 = sbr.rel (%p348) target = $region44
        $region43: #{tpu_custom_call.1} parent=39 // pred_region
          %351 = dma.done %s344, 2048
        $region44: #{tpu_custom_call.1} parent=39 // pred_fallthru
          _
        %s352 = sand.u32 %s34, 1
        %s353 = scalar_lea.sflag [#allocation7], %s352
        %s354 = sand.u32 %s82, 1
        %s355 = smul.addr %s354, 64
        %s356 = scalar_lea.vmem [#allocation6], %s355
        // Predicated region
        $region45: #{tpu_custom_call.1} parent=39 // pred_check
          %p357 = pneg %p95
        $region46: #{tpu_custom_call.1} parent=39 // pred_check_branch
          %359 = sbr.rel (%p357) target = $region48
        $region47: #{tpu_custom_call.1} parent=39 // pred_region
          %360 = dma.done %s353, 1024
        $region48: #{tpu_custom_call.1} parent=39 // pred_fallthru
          _
        %s361 = sand.u32 %s34, 1
        %s362 = scalar_lea.sflag [#allocation7], %s361
        %s363 = sand.u32 %s110, 1
        %s364 = smul.addr %s363, 64
        %s365 = scalar_lea.vmem [#allocation8], %s364
        // Predicated region
        $region49: #{tpu_custom_call.1} parent=39 // pred_check
          %p366 = pneg %p123
        $region50: #{tpu_custom_call.1} parent=39 // pred_check_branch
          %368 = sbr.rel (%p366) target = $region52
        $region51: #{tpu_custom_call.1} parent=39 // pred_region
          %369 = dma.done %s362, 1024
        $region52: #{tpu_custom_call.1} parent=39 // pred_fallthru
          _
        %s370 = sand.u32 %s136, 1
        %s371 = scalar_lea.sflag [#allocation10], %s370
        %s372 = sand.u32 %s136, 1
        %s373 = smul.addr %s372, 64
        %s374 = scalar_lea.vmem [#allocation9], %s373
        // Predicated region
        $region53: #{tpu_custom_call.1} parent=39 // pred_check
          %p375 = pneg %p149
        $region54: #{tpu_custom_call.1} parent=39 // pred_check_branch
          %377 = sbr.rel (%p375) target = $region56
        $region55: #{tpu_custom_call.1} parent=39 // pred_region
          %378 = dma.done %s371, 1024
        $region56: #{tpu_custom_call.1} parent=39 // pred_fallthru
          _
        %s379 = sand.u32 %s56, 1
        %s380 = scalar_lea.sflag [#allocation4], %s379
        %s381 = sand.u32 %s56, 1
        %s382 = smul.addr %s381, 128
        %s383 = scalar_lea.vmem [#allocation3], %s382
        %p384 = pneg %p69
        %p385 = pneg %p66
        %s386 = sand.u32 %s34, 1
        %s387 = scalar_lea.sflag [#allocation7], %s386
        %s388 = sand.u32 %s82, 1
        %s389 = smul.addr %s388, 64
        %s390 = scalar_lea.vmem [#allocation6], %s389
        %p391 = pneg %p95
        %p392 = pneg %p92
        %s393 = sand.u32 %s34, 1
        %s394 = scalar_lea.sflag [#allocation7], %s393
        %s395 = sand.u32 %s110, 1
        %s396 = smul.addr %s395, 64
        %s397 = scalar_lea.vmem [#allocation8], %s396
        %p398 = pneg %p123
        %p399 = pneg %p120
        %s400 = sand.u32 %s136, 1
        %s401 = scalar_lea.sflag [#allocation10], %s400
        %s402 = sand.u32 %s136, 1
        %s403 = smul.addr %s402, 64
        %s404 = scalar_lea.vmem [#allocation9], %s403
        %p405 = pneg %p149
        %p406 = pneg %p146
        %p407 = pneg %p170
        %p408 = pneg %p167
        %p409 = pneg %p198
        %p410 = pneg %p195
        %s411 = sand.u32 %s185, 1
        %s412 = scalar_lea.sflag [#allocation5], %s411
        %s413 = sand.u32 %s185, 1
        %s414 = smul.addr %s413, 128
        %s415 = scalar_lea.vmem [#allocation11], %s414
        %p416 = pneg %p226
        %p417 = pneg %p223
        %s418 = sand.u32 %s213, 1
        %s419 = scalar_lea.sflag [#allocation13], %s418
        %s420 = sand.u32 %s213, 1
        %s421 = smul.addr %s420, 64
        %s422 = scalar_lea.vmem [#allocation12], %s421
        %s423 = smul.u32 16, %s39
        %s424 = smul.u32 16, %s39
        %s425 = smul.u32 16, %s39
        %s426 = smul.u32 16, %s39
        %v428 = vld [vmem:[%s365] sm:$0xf]
        %v429 = vld [vmem:[%s365 + $0x4] sm:$0xf]
        %v430 = vld [vmem:[%s365 + $0x8] sm:$0xf]
        %v431 = vld [vmem:[%s365 + $0xc] sm:$0xf]
        %v432 = vld [vmem:[%s365 + $0x10] sm:$0xf]
        %v433 = vld [vmem:[%s365 + $0x14] sm:$0xf]
        %v434 = vld [vmem:[%s365 + $0x18] sm:$0xf]
        %v435 = vld [vmem:[%s365 + $0x1c] sm:$0xf]
        %v436 = vld [vmem:[%s365 + $0x20] sm:$0xf]
        %v437 = vld [vmem:[%s365 + $0x24] sm:$0xf]
        %v438 = vld [vmem:[%s365 + $0x28] sm:$0xf]
        %v439 = vld [vmem:[%s365 + $0x2c] sm:$0xf]
        %v440 = vld [vmem:[%s365 + $0x30] sm:$0xf]
        %v441 = vld [vmem:[%s365 + $0x34] sm:$0xf]
        %v442 = vld [vmem:[%s365 + $0x38] sm:$0xf]
        %v443 = vld [vmem:[%s365 + $0x3c] sm:$0xf]
        %v444 = vld [vmem:[%s356] sm:$0xf]
        %v445 = vld [vmem:[%s356 + $0x4] sm:$0xf]
        %v446 = vld [vmem:[%s356 + $0x8] sm:$0xf]
        %v447 = vld [vmem:[%s356 + $0xc] sm:$0xf]
        %v448 = vld [vmem:[%s356 + $0x10] sm:$0xf]
        %v449 = vld [vmem:[%s356 + $0x14] sm:$0xf]
        %v450 = vld [vmem:[%s356 + $0x18] sm:$0xf]
        %v451 = vld [vmem:[%s356 + $0x1c] sm:$0xf]
        %v452 = vld [vmem:[%s356 + $0x20] sm:$0xf]
        %v453 = vld [vmem:[%s356 + $0x24] sm:$0xf]
        %v454 = vld [vmem:[%s356 + $0x28] sm:$0xf]
        %v455 = vld [vmem:[%s356 + $0x2c] sm:$0xf]
        %v456 = vld [vmem:[%s356 + $0x30] sm:$0xf]
        %v457 = vld [vmem:[%s356 + $0x34] sm:$0xf]
        %v458 = vld [vmem:[%s356 + $0x38] sm:$0xf]
        %v459 = vld [vmem:[%s356 + $0x3c] sm:$0xf]
        %v476 = vunpack.c.l.b16 %v428
        %v477 = vunpack.c.l.b16 %v429
        %v478 = vunpack.c.l.b16 %v430
        %v479 = vunpack.c.l.b16 %v431
        %v480 = vunpack.c.l.b16 %v432
        %v481 = vunpack.c.l.b16 %v433
        %v482 = vunpack.c.l.b16 %v434
        %v483 = vunpack.c.l.b16 %v435
        %v484 = vunpack.c.l.b16 %v436
        %v485 = vunpack.c.l.b16 %v437
        %v486 = vunpack.c.l.b16 %v438
        %v487 = vunpack.c.l.b16 %v439
        %v488 = vunpack.c.l.b16 %v440
        %v489 = vunpack.c.l.b16 %v441
        %v490 = vunpack.c.l.b16 %v442
        %v491 = vunpack.c.l.b16 %v443
        %v492 = vpack.c.b16 %v477, %v476
        %v493 = vpack.c.b16 %v479, %v478
        %v494 = vpack.c.b16 %v481, %v480
        %v495 = vpack.c.b16 %v483, %v482
        %v496 = vpack.c.b16 %v485, %v484
        %v497 = vpack.c.b16 %v487, %v486
        %v498 = vpack.c.b16 %v489, %v488
        %v499 = vpack.c.b16 %v491, %v490
        %v524 = vunpack.c.l.b16 %v444
        %v525 = vunpack.c.l.b16 %v445
        %v526 = vunpack.c.l.b16 %v446
        %v527 = vunpack.c.l.b16 %v447
        %v528 = vunpack.c.l.b16 %v448
        %v529 = vunpack.c.l.b16 %v449
        %v530 = vunpack.c.l.b16 %v450
        %v531 = vunpack.c.l.b16 %v451
        %v532 = vunpack.c.l.b16 %v452
        %v533 = vunpack.c.l.b16 %v453
        %v534 = vunpack.c.l.b16 %v454
        %v535 = vunpack.c.l.b16 %v455
        %v536 = vunpack.c.l.b16 %v456
        %v537 = vunpack.c.l.b16 %v457
        %v538 = vunpack.c.l.b16 %v458
        %v539 = vunpack.c.l.b16 %v459
        %v540 = vpack.c.b16 %v525, %v524
        %v541 = vpack.c.b16 %v527, %v526
        %v542 = vpack.c.b16 %v529, %v528
        %v543 = vpack.c.b16 %v531, %v530
        %v544 = vpack.c.b16 %v533, %v532
        %v545 = vpack.c.b16 %v535, %v534
        %v546 = vpack.c.b16 %v537, %v536
        %v547 = vpack.c.b16 %v539, %v538
        %556 = vmatprep.subr.bf16.mxu0 0
        %557 = vmatpush1.bf16.msra.mxu0 %v540
        %558 = vmatprep.subr.bf16.mxu0 0
        %559 = vmatpush1.bf16.msra.mxu0 %v541
        %560 = vmatprep.subr.bf16.mxu0 0
        %561 = vmatpush1.bf16.msra.mxu0 %v542
        %562 = vmatprep.subr.bf16.mxu0 0
        %563 = vmatpush1.bf16.msra.mxu0 %v543
        %564 = vmatprep.subr.bf16.mxu0 0
        %565 = vmatpush1.bf16.msra.mxu0 %v544
        %566 = vmatprep.subr.bf16.mxu0 0
        %567 = vmatpush1.bf16.msra.mxu0 %v545
        %568 = vmatprep.subr.bf16.mxu0 0
        %569 = vmatpush1.bf16.msra.mxu0 %v546
        %570 = vmatprep.subr.bf16.mxu0 0
        %571 = vmatpush1.bf16.msra.mxu0 %v547
        %572 = vmatprep.subr.bf16.mxu0 0
        %573 = vmatpush1.bf16.msra.mxu0 0
        %574 = vmatprep.subr.bf16.mxu0 0
        %575 = vmatpush1.bf16.msra.mxu0 0
        %576 = vmatprep.subr.bf16.mxu0 0
        %577 = vmatpush1.bf16.msra.mxu0 0
        %578 = vmatprep.subr.bf16.mxu0 0
        %579 = vmatpush1.bf16.msra.mxu0 0
        %580 = vmatprep.subr.bf16.mxu0 0
        %581 = vmatpush1.bf16.msra.mxu0 0
        %582 = vmatprep.subr.bf16.mxu0 0
        %583 = vmatpush1.bf16.msra.mxu0 0
        %584 = vmatprep.subr.bf16.mxu0 0
        %585 = vmatpush1.bf16.msra.mxu0 0
        %586 = vmatprep.subr.bf16.mxu0 0
        %587 = vmatpush1.bf16.msra.mxu0 0
        %588 = vmatprep.mubr.bf16.mxu0 0
        %589 = vmatmul.mubr.bf16.gmra.mrb[0].mxu0 %v492
        %v590 = vpop.f32.mrb[0].mxu0
        %v591 = vadd.f32 0.0, %v590
        %v592 = vpop.f32.mrb[0].mxu0
        %v593 = vpop.f32.mrb[0].mxu0
        %v594 = vadd.f32 0.0, %v593
        %v595 = vpop.f32.mrb[0].mxu0
        %596 = vmatprep.mubr.bf16.mxu0 0
        %597 = vmatmul.mubr.bf16.gmra.mrb[0].mxu0 %v493
        %v598 = vpop.f32.mrb[0].mxu0
        %v599 = vadd.f32 0.0, %v598
        %v600 = vpop.f32.mrb[0].mxu0
        %v601 = vpop.f32.mrb[0].mxu0
        %v602 = vadd.f32 0.0, %v601
        %v603 = vpop.f32.mrb[0].mxu0
        %604 = vmatprep.mubr.bf16.mxu0 0
        %605 = vmatmul.mubr.bf16.gmra.mrb[0].mxu0 %v494
        %v606 = vpop.f32.mrb[0].mxu0
        %v607 = vadd.f32 0.0, %v606
        %v608 = vpop.f32.mrb[0].mxu0
        %v609 = vpop.f32.mrb[0].mxu0
        %v610 = vadd.f32 0.0, %v609
        %v611 = vpop.f32.mrb[0].mxu0
        %612 = vmatprep.mubr.bf16.mxu0 0
        %613 = vmatmul.mubr.bf16.gmra.mrb[0].mxu0 %v495
        %v614 = vpop.f32.mrb[0].mxu0
        %v615 = vadd.f32 0.0, %v614
        %v616 = vpop.f32.mrb[0].mxu0
        %v617 = vpop.f32.mrb[0].mxu0
        %v618 = vadd.f32 0.0, %v617
        %v619 = vpop.f32.mrb[0].mxu0
        %620 = vmatprep.mubr.bf16.mxu0 0
        %621 = vmatmul.mubr.bf16.gmra.mrb[0].mxu0 %v496
        %v622 = vpop.f32.mrb[0].mxu0
        %v623 = vadd.f32 0.0, %v622
        %v624 = vpop.f32.mrb[0].mxu0
        %v625 = vpop.f32.mrb[0].mxu0
        %v626 = vadd.f32 0.0, %v625
        %v627 = vpop.f32.mrb[0].mxu0
        %628 = vmatprep.mubr.bf16.mxu0 0
        %629 = vmatmul.mubr.bf16.gmra.mrb[0].mxu0 %v497
        %v630 = vpop.f32.mrb[0].mxu0
        %v631 = vadd.f32 0.0, %v630
        %v632 = vpop.f32.mrb[0].mxu0
        %v633 = vpop.f32.mrb[0].mxu0
        %v634 = vadd.f32 0.0, %v633
        %v635 = vpop.f32.mrb[0].mxu0
        %636 = vmatprep.mubr.bf16.mxu0 0
        %637 = vmatmul.mubr.bf16.gmra.mrb[0].mxu0 %v498
        %v638 = vpop.f32.mrb[0].mxu0
        %v639 = vadd.f32 0.0, %v638
        %v640 = vpop.f32.mrb[0].mxu0
        %v641 = vpop.f32.mrb[0].mxu0
        %v642 = vadd.f32 0.0, %v641
        %v643 = vpop.f32.mrb[0].mxu0
        %644 = vmatprep.mubr.bf16.mxu0 0
        %645 = vmatmul.mubr.bf16.gmra.mrb[0].mxu0 %v499
        %v646 = vpop.f32.mrb[0].mxu0
        %v647 = vadd.f32 0.0, %v646
        %v648 = vpop.f32.mrb[0].mxu0
        %v649 = vpop.f32.mrb[0].mxu0
        %v650 = vadd.f32 0.0, %v649
        %v651 = vpop.f32.mrb[0].mxu0
        %652 = vdwg.mxu0
        %v653 = vlaneseq
        %v654 = vand.u32 %v653, 127
        %vm655 = vcmp.lt.s32.totalorder %v654, 64
        %v656 = vsel %vm655, %v591, -1e+30
        %v657 = vsel %vm655, %v594, -1e+30
        %v658 = vsel %vm655, %v599, -1e+30
        %v659 = vsel %vm655, %v602, -1e+30
        %v660 = vsel %vm655, %v607, -1e+30
        %v661 = vsel %vm655, %v610, -1e+30
        %v662 = vsel %vm655, %v615, -1e+30
        %v663 = vsel %vm655, %v618, -1e+30
        %v664 = vsel %vm655, %v623, -1e+30
        %v665 = vsel %vm655, %v626, -1e+30
        %v666 = vsel %vm655, %v631, -1e+30
        %v667 = vsel %vm655, %v634, -1e+30
        %v668 = vsel %vm655, %v639, -1e+30
        %v669 = vsel %vm655, %v642, -1e+30
        %v670 = vsel %vm655, %v647, -1e+30
        %v671 = vsel %vm655, %v650, -1e+30
        %672 = vmax.xlane.f32.xlu0 %v656
        %v673 = vpop.xlane.xlu0 %672
        %674 = vmax.xlane.f32.xlu0 %v657
        %v675 = vpop.xlane.xlu0 %674
        %676 = vmax.xlane.f32.xlu0 %v658
        %v677 = vpop.xlane.xlu0 %676
        %678 = vmax.xlane.f32.xlu0 %v659
        %v679 = vpop.xlane.xlu0 %678
        %680 = vmax.xlane.f32.xlu0 %v660
        %v681 = vpop.xlane.xlu0 %680
        %682 = vmax.xlane.f32.xlu0 %v661
        %v683 = vpop.xlane.xlu0 %682
        %684 = vmax.xlane.f32.xlu0 %v662
        %v685 = vpop.xlane.xlu0 %684
        %686 = vmax.xlane.f32.xlu0 %v663
        %v687 = vpop.xlane.xlu0 %686
        %688 = vmax.xlane.f32.xlu0 %v664
        %v689 = vpop.xlane.xlu0 %688
        %690 = vmax.xlane.f32.xlu0 %v665
        %v691 = vpop.xlane.xlu0 %690
        %692 = vmax.xlane.f32.xlu0 %v666
        %v693 = vpop.xlane.xlu0 %692
        %694 = vmax.xlane.f32.xlu0 %v667
        %v695 = vpop.xlane.xlu0 %694
        %696 = vmax.xlane.f32.xlu0 %v668
        %v697 = vpop.xlane.xlu0 %696
        %698 = vmax.xlane.f32.xlu0 %v669
        %v699 = vpop.xlane.xlu0 %698
        %700 = vmax.xlane.f32.xlu0 %v670
        %v701 = vpop.xlane.xlu0 %700
        %702 = vmax.xlane.f32.xlu0 %v671
        %v703 = vpop.xlane.xlu0 %702
        %v704 = vsub.f32 %v656, %v673
        %v705 = vsub.f32 %v657, %v675
        %v706 = vsub.f32 %v658, %v677
        %v707 = vsub.f32 %v659, %v679
        %v708 = vsub.f32 %v660, %v681
        %v709 = vsub.f32 %v661, %v683
        %v710 = vsub.f32 %v662, %v685
        %v711 = vsub.f32 %v663, %v687
        %v712 = vsub.f32 %v664, %v689
        %v713 = vsub.f32 %v665, %v691
        %v714 = vsub.f32 %v666, %v693
        %v715 = vsub.f32 %v667, %v695
        %v716 = vsub.f32 %v668, %v697
        %v717 = vsub.f32 %v669, %v699
        %v718 = vsub.f32 %v670, %v701
        %v719 = vsub.f32 %v671, %v703
        %v720 = vmul.f32 %v704, 1.442695
        %v721 = vpow.pop %v720
        %v722 = vmul.f32 %v705, 1.442695
        %v723 = vpow.pop %v722
        %v724 = vmul.f32 %v706, 1.442695
        %v725 = vpow.pop %v724
        %v726 = vmul.f32 %v707, 1.442695
        %v727 = vpow.pop %v726
        %v728 = vmul.f32 %v708, 1.442695
        %v729 = vpow.pop %v728
        %v730 = vmul.f32 %v709, 1.442695
        %v731 = vpow.pop %v730
        %v732 = vmul.f32 %v710, 1.442695
        %v733 = vpow.pop %v732
        %v734 = vmul.f32 %v711, 1.442695
        %v735 = vpow.pop %v734
        %v736 = vmul.f32 %v712, 1.442695
        %v737 = vpow.pop %v736
        %v738 = vmul.f32 %v713, 1.442695
        %v739 = vpow.pop %v738
        %v740 = vmul.f32 %v714, 1.442695
        %v741 = vpow.pop %v740
        %v742 = vmul.f32 %v715, 1.442695
        %v743 = vpow.pop %v742
        %v744 = vmul.f32 %v716, 1.442695
        %v745 = vpow.pop %v744
        %v746 = vmul.f32 %v717, 1.442695
        %v747 = vpow.pop %v746
        %v748 = vmul.f32 %v718, 1.442695
        %v749 = vpow.pop %v748
        %v750 = vmul.f32 %v719, 1.442695
        %v751 = vpow.pop %v750
        %752 = vadd.xlane.f32.xlu0 %v721
        %v753 = vpop.xlane.xlu0 %752
        %754 = vadd.xlane.f32.xlu0 %v723
        %v755 = vpop.xlane.xlu0 %754
        %756 = vadd.xlane.f32.xlu0 %v725
        %v757 = vpop.xlane.xlu0 %756
        %758 = vadd.xlane.f32.xlu0 %v727
        %v759 = vpop.xlane.xlu0 %758
        %760 = vadd.xlane.f32.xlu0 %v729
        %v761 = vpop.xlane.xlu0 %760
        %762 = vadd.xlane.f32.xlu0 %v731
        %v763 = vpop.xlane.xlu0 %762
        %764 = vadd.xlane.f32.xlu0 %v733
        %v765 = vpop.xlane.xlu0 %764
        %766 = vadd.xlane.f32.xlu0 %v735
        %v767 = vpop.xlane.xlu0 %766
        %768 = vadd.xlane.f32.xlu0 %v737
        %v769 = vpop.xlane.xlu0 %768
        %770 = vadd.xlane.f32.xlu0 %v739
        %v771 = vpop.xlane.xlu0 %770
        %772 = vadd.xlane.f32.xlu0 %v741
        %v773 = vpop.xlane.xlu0 %772
        %774 = vadd.xlane.f32.xlu0 %v743
        %v775 = vpop.xlane.xlu0 %774
        %776 = vadd.xlane.f32.xlu0 %v745
        %v777 = vpop.xlane.xlu0 %776
        %778 = vadd.xlane.f32.xlu0 %v747
        %v779 = vpop.xlane.xlu0 %778
        %780 = vadd.xlane.f32.xlu0 %v749
        %v781 = vpop.xlane.xlu0 %780
        %782 = vadd.xlane.f32.xlu0 %v751
        %v783 = vpop.xlane.xlu0 %782
        %v784 = vrcp.pop %v753
        %v785 = vmul.f32 1.0, %v784
        %v786 = vrcp.pop %v755
        %v787 = vmul.f32 1.0, %v786
        %v788 = vrcp.pop %v757
        %v789 = vmul.f32 1.0, %v788
        %v790 = vrcp.pop %v759
        %v791 = vmul.f32 1.0, %v790
        %v792 = vrcp.pop %v761
        %v793 = vmul.f32 1.0, %v792
        %v794 = vrcp.pop %v763
        %v795 = vmul.f32 1.0, %v794
        %v796 = vrcp.pop %v765
        %v797 = vmul.f32 1.0, %v796
        %v798 = vrcp.pop %v767
        %v799 = vmul.f32 1.0, %v798
        %v800 = vrcp.pop %v769
        %v801 = vmul.f32 1.0, %v800
        %v802 = vrcp.pop %v771
        %v803 = vmul.f32 1.0, %v802
        %v804 = vrcp.pop %v773
        %v805 = vmul.f32 1.0, %v804
        %v806 = vrcp.pop %v775
        %v807 = vmul.f32 1.0, %v806
        %v808 = vrcp.pop %v777
        %v809 = vmul.f32 1.0, %v808
        %v810 = vrcp.pop %v779
        %v811 = vmul.f32 1.0, %v810
        %v812 = vrcp.pop %v781
        %v813 = vmul.f32 1.0, %v812
        %v814 = vrcp.pop %v783
        %v815 = vmul.f32 1.0, %v814
        %v816 = vmul.f32 %v721, %v785
        %v817 = vmul.f32 %v723, %v787
        %v818 = vmul.f32 %v725, %v789
        %v819 = vmul.f32 %v727, %v791
        %v820 = vmul.f32 %v729, %v793
        %v821 = vmul.f32 %v731, %v795
        %v822 = vmul.f32 %v733, %v797
        %v823 = vmul.f32 %v735, %v799
        %v824 = vmul.f32 %v737, %v801
        %v825 = vmul.f32 %v739, %v803
        %v826 = vmul.f32 %v741, %v805
        %v827 = vmul.f32 %v743, %v807
        %v828 = vmul.f32 %v745, %v809
        %v829 = vmul.f32 %v747, %v811
        %v830 = vmul.f32 %v749, %v813
        %v831 = vmul.f32 %v751, %v815
        %v832 = vpack.c.bf16 %v817, %v816
        %v833 = vpack.c.bf16 %v819, %v818
        %v834 = vpack.c.bf16 %v821, %v820
        %v835 = vpack.c.bf16 %v823, %v822
        %v836 = vpack.c.bf16 %v825, %v824
        %v837 = vpack.c.bf16 %v827, %v826
        %v838 = vpack.c.bf16 %v829, %v828
        %v839 = vpack.c.bf16 %v831, %v830
        %v848 = vunpack.c.l.b16 %v832
        %v849 = vunpack.c.h.b16 %v832
        %v850 = vunpack.c.l.b16 %v833
        %v851 = vunpack.c.h.b16 %v833
        %v852 = vunpack.c.l.b16 %v834
        %v853 = vunpack.c.h.b16 %v834
        %v854 = vunpack.c.l.b16 %v835
        %v855 = vunpack.c.h.b16 %v835
        %v856 = vunpack.c.l.b16 %v836
        %v857 = vunpack.c.h.b16 %v836
        %v858 = vunpack.c.l.b16 %v837
        %v859 = vunpack.c.h.b16 %v837
        %v860 = vunpack.c.l.b16 %v838
        %v861 = vunpack.c.h.b16 %v838
        %v862 = vunpack.c.l.b16 %v839
        %v863 = vunpack.c.h.b16 %v839
        %v864 = vpack.c.b16 %v848, %v848
        %v865 = vpack.c.b16 %v849, %v849
        %v866 = vpack.c.b16 %v850, %v850
        %v867 = vpack.c.b16 %v851, %v851
        %v868 = vpack.c.b16 %v852, %v852
        %v869 = vpack.c.b16 %v853, %v853
        %v870 = vpack.c.b16 %v854, %v854
        %v871 = vpack.c.b16 %v855, %v855
        %v872 = vpack.c.b16 %v856, %v856
        %v873 = vpack.c.b16 %v857, %v857
        %v874 = vpack.c.b16 %v858, %v858
        %v875 = vpack.c.b16 %v859, %v859
        %v876 = vpack.c.b16 %v860, %v860
        %v877 = vpack.c.b16 %v861, %v861
        %v878 = vpack.c.b16 %v862, %v862
        %v879 = vpack.c.b16 %v863, %v863
        %896 = vst [vmem:[%s422] sm:$0xf] %v864
        %897 = vst [vmem:[%s422 + $0x4] sm:$0xf] %v865
        %898 = vst [vmem:[%s422 + $0x8] sm:$0xf] %v866
        %899 = vst [vmem:[%s422 + $0xc] sm:$0xf] %v867
        %900 = vst [vmem:[%s422 + $0x10] sm:$0xf] %v868
        %901 = vst [vmem:[%s422 + $0x14] sm:$0xf] %v869
        %902 = vst [vmem:[%s422 + $0x18] sm:$0xf] %v870
        %903 = vst [vmem:[%s422 + $0x1c] sm:$0xf] %v871
        %904 = vst [vmem:[%s422 + $0x20] sm:$0xf] %v872
        %905 = vst [vmem:[%s422 + $0x24] sm:$0xf] %v873
        %906 = vst [vmem:[%s422 + $0x28] sm:$0xf] %v874
        %907 = vst [vmem:[%s422 + $0x2c] sm:$0xf] %v875
        %908 = vst [vmem:[%s422 + $0x30] sm:$0xf] %v876
        %909 = vst [vmem:[%s422 + $0x34] sm:$0xf] %v877
        %910 = vst [vmem:[%s422 + $0x38] sm:$0xf] %v878
        %911 = vst [vmem:[%s422 + $0x3c] sm:$0xf] %v879
        %v912 = vld [vmem:[%s374] sm:$0xf]
        %v913 = vld [vmem:[%s374 + $0x4] sm:$0xf]
        %v914 = vld [vmem:[%s374 + $0x8] sm:$0xf]
        %v915 = vld [vmem:[%s374 + $0xc] sm:$0xf]
        %v916 = vld [vmem:[%s374 + $0x10] sm:$0xf]
        %v917 = vld [vmem:[%s374 + $0x14] sm:$0xf]
        %v918 = vld [vmem:[%s374 + $0x18] sm:$0xf]
        %v919 = vld [vmem:[%s374 + $0x1c] sm:$0xf]
        %v920 = vld [vmem:[%s374 + $0x20] sm:$0xf]
        %v921 = vld [vmem:[%s374 + $0x24] sm:$0xf]
        %v922 = vld [vmem:[%s374 + $0x28] sm:$0xf]
        %v923 = vld [vmem:[%s374 + $0x2c] sm:$0xf]
        %v924 = vld [vmem:[%s374 + $0x30] sm:$0xf]
        %v925 = vld [vmem:[%s374 + $0x34] sm:$0xf]
        %v926 = vld [vmem:[%s374 + $0x38] sm:$0xf]
        %v927 = vld [vmem:[%s374 + $0x3c] sm:$0xf]
        %v944 = vunpack.c.l.b16 %v912
        %v945 = vunpack.c.l.b16 %v913
        %v946 = vunpack.c.l.b16 %v914
        %v947 = vunpack.c.l.b16 %v915
        %v948 = vunpack.c.l.b16 %v916
        %v949 = vunpack.c.l.b16 %v917
        %v950 = vunpack.c.l.b16 %v918
        %v951 = vunpack.c.l.b16 %v919
        %v952 = vunpack.c.l.b16 %v920
        %v953 = vunpack.c.l.b16 %v921
        %v954 = vunpack.c.l.b16 %v922
        %v955 = vunpack.c.l.b16 %v923
        %v956 = vunpack.c.l.b16 %v924
        %v957 = vunpack.c.l.b16 %v925
        %v958 = vunpack.c.l.b16 %v926
        %v959 = vunpack.c.l.b16 %v927
        %v960 = vpack.c.b16 %v945, %v944
        %v961 = vpack.c.b16 %v947, %v946
        %v962 = vpack.c.b16 %v949, %v948
        %v963 = vpack.c.b16 %v951, %v950
        %v964 = vpack.c.b16 %v953, %v952
        %v965 = vpack.c.b16 %v955, %v954
        %v966 = vpack.c.b16 %v957, %v956
        %v967 = vpack.c.b16 %v959, %v958
        %976 = vmatprep.subr.bf16.mxu0 0
        %977 = vmatpush1.bf16.msra.mxu0 %v960
        %978 = vmatprep.subr.bf16.mxu0 0
        %979 = vmatpush1.bf16.msra.mxu0 %v961
        %980 = vmatprep.subr.bf16.mxu0 0
        %981 = vmatpush1.bf16.msra.mxu0 %v962
        %982 = vmatprep.subr.bf16.mxu0 0
        %983 = vmatpush1.bf16.msra.mxu0 %v963
        %984 = vmatprep.subr.bf16.mxu0 0
        %985 = vmatpush1.bf16.msra.mxu0 %v964
        %986 = vmatprep.subr.bf16.mxu0 0
        %987 = vmatpush1.bf16.msra.mxu0 %v965
        %988 = vmatprep.subr.bf16.mxu0 0
        %989 = vmatpush1.bf16.msra.mxu0 %v966
        %990 = vmatprep.subr.bf16.mxu0 0
        %991 = vmatpush1.bf16.msra.mxu0 %v967
        %992 = vmatprep.subr.bf16.mxu0 0
        %993 = vmatpush1.bf16.msra.mxu0 0
        %994 = vmatprep.subr.bf16.mxu0 0
        %995 = vmatpush1.bf16.msra.mxu0 0
        %996 = vmatprep.subr.bf16.mxu0 0
        %997 = vmatpush1.bf16.msra.mxu0 0
        %998 = vmatprep.subr.bf16.mxu0 0
        %999 = vmatpush1.bf16.msra.mxu0 0
        %1000 = vmatprep.subr.bf16.mxu0 0
        %1001 = vmatpush1.bf16.msra.mxu0 0
        %1002 = vmatprep.subr.bf16.mxu0 0
        %1003 = vmatpush1.bf16.msra.mxu0 0
        %1004 = vmatprep.subr.bf16.mxu0 0
        %1005 = vmatpush1.bf16.msra.mxu0 0
        %1006 = vmatprep.subr.bf16.mxu0 0
        %1007 = vmatpush1.bf16.msra.mxu0 0
        %1008 = vmatprep.mubr.bf16.mxu0 0
        %1009 = vmatmul.mubr.bf16.gmra.mrb[0].mxu0 %v832
        %v1010 = vpop.f32.mrb[0].mxu0
        %v1011 = vadd.f32 0.0, %v1010
        %v1012 = vpop.f32.mrb[0].mxu0
        %v1013 = vpop.f32.mrb[0].mxu0
        %v1014 = vadd.f32 0.0, %v1013
        %v1015 = vpop.f32.mrb[0].mxu0
        %1016 = vmatprep.mubr.bf16.mxu0 0
        %1017 = vmatmul.mubr.bf16.gmra.mrb[0].mxu0 %v833
        %v1018 = vpop.f32.mrb[0].mxu0
        %v1019 = vadd.f32 0.0, %v1018
        %v1020 = vpop.f32.mrb[0].mxu0
        %v1021 = vpop.f32.mrb[0].mxu0
        %v1022 = vadd.f32 0.0, %v1021
        %v1023 = vpop.f32.mrb[0].mxu0
        %1024 = vmatprep.mubr.bf16.mxu0 0
        %1025 = vmatmul.mubr.bf16.gmra.mrb[0].mxu0 %v834
        %v1026 = vpop.f32.mrb[0].mxu0
        %v1027 = vadd.f32 0.0, %v1026
        %v1028 = vpop.f32.mrb[0].mxu0
        %v1029 = vpop.f32.mrb[0].mxu0
        %v1030 = vadd.f32 0.0, %v1029
        %v1031 = vpop.f32.mrb[0].mxu0
        %1032 = vmatprep.mubr.bf16.mxu0 0
        %1033 = vmatmul.mubr.bf16.gmra.mrb[0].mxu0 %v835
        %v1034 = vpop.f32.mrb[0].mxu0
        %v1035 = vadd.f32 0.0, %v1034
        %v1036 = vpop.f32.mrb[0].mxu0
        %v1037 = vpop.f32.mrb[0].mxu0
        %v1038 = vadd.f32 0.0, %v1037
        %v1039 = vpop.f32.mrb[0].mxu0
        %1040 = vmatprep.mubr.bf16.mxu0 0
        %1041 = vmatmul.mubr.bf16.gmra.mrb[0].mxu0 %v836
        %v1042 = vpop.f32.mrb[0].mxu0
        %v1043 = vadd.f32 0.0, %v1042
        %v1044 = vpop.f32.mrb[0].mxu0
        %v1045 = vpop.f32.mrb[0].mxu0
        %v1046 = vadd.f32 0.0, %v1045
        %v1047 = vpop.f32.mrb[0].mxu0
        %1048 = vmatprep.mubr.bf16.mxu0 0
        %1049 = vmatmul.mubr.bf16.gmra.mrb[0].mxu0 %v837
        %v1050 = vpop.f32.mrb[0].mxu0
        %v1051 = vadd.f32 0.0, %v1050
        %v1052 = vpop.f32.mrb[0].mxu0
        %v1053 = vpop.f32.mrb[0].mxu0
        %v1054 = vadd.f32 0.0, %v1053
        %v1055 = vpop.f32.mrb[0].mxu0
        %1056 = vmatprep.mubr.bf16.mxu0 0
        %1057 = vmatmul.mubr.bf16.gmra.mrb[0].mxu0 %v838
        %v1058 = vpop.f32.mrb[0].mxu0
        %v1059 = vadd.f32 0.0, %v1058
        %v1060 = vpop.f32.mrb[0].mxu0
        %v1061 = vpop.f32.mrb[0].mxu0
        %v1062 = vadd.f32 0.0, %v1061
        %v1063 = vpop.f32.mrb[0].mxu0
        %1064 = vmatprep.mubr.bf16.mxu0 0
        %1065 = vmatmul.mubr.bf16.gmra.mrb[0].mxu0 %v839
        %v1066 = vpop.f32.mrb[0].mxu0
        %v1067 = vadd.f32 0.0, %v1066
        %v1068 = vpop.f32.mrb[0].mxu0
        %v1069 = vpop.f32.mrb[0].mxu0
        %v1070 = vadd.f32 0.0, %v1069
        %v1071 = vpop.f32.mrb[0].mxu0
        %1072 = vdwg.mxu0
        %v1073 = vld [vmem:[%s347] sm:$0xff]
        %v1074 = vld [vmem:[%s347 + $0x8] sm:$0xff]
        %v1075 = vld [vmem:[%s347 + $0x10] sm:$0xff]
        %v1076 = vld [vmem:[%s347 + $0x18] sm:$0xff]
        %v1077 = vld [vmem:[%s347 + $0x20] sm:$0xff]
        %v1078 = vld [vmem:[%s347 + $0x28] sm:$0xff]
        %v1079 = vld [vmem:[%s347 + $0x30] sm:$0xff]
        %v1080 = vld [vmem:[%s347 + $0x38] sm:$0xff]
        %v1081 = vld [vmem:[%s347 + $0x40] sm:$0xff]
        %v1082 = vld [vmem:[%s347 + $0x48] sm:$0xff]
        %v1083 = vld [vmem:[%s347 + $0x50] sm:$0xff]
        %v1084 = vld [vmem:[%s347 + $0x58] sm:$0xff]
        %v1085 = vld [vmem:[%s347 + $0x60] sm:$0xff]
        %v1086 = vld [vmem:[%s347 + $0x68] sm:$0xff]
        %v1087 = vld [vmem:[%s347 + $0x70] sm:$0xff]
        %v1088 = vld [vmem:[%s347 + $0x78] sm:$0xff]
        %s1089 = sld [smem:[#allocation2]]
        %v1090 = vstv %s1089
        %v1091 = vmul.f32 %v1090, %v1011
        %v1092 = vmul.f32 %v1090, %v1014
        %v1093 = vmul.f32 %v1090, %v1019
        %v1094 = vmul.f32 %v1090, %v1022
        %v1095 = vmul.f32 %v1090, %v1027
        %v1096 = vmul.f32 %v1090, %v1030
        %v1097 = vmul.f32 %v1090, %v1035
        %v1098 = vmul.f32 %v1090, %v1038
        %v1099 = vmul.f32 %v1090, %v1043
        %v1100 = vmul.f32 %v1090, %v1046
        %v1101 = vmul.f32 %v1090, %v1051
        %v1102 = vmul.f32 %v1090, %v1054
        %v1103 = vmul.f32 %v1090, %v1059
        %v1104 = vmul.f32 %v1090, %v1062
        %v1105 = vmul.f32 %v1090, %v1067
        %v1106 = vmul.f32 %v1090, %v1070
        %v1107 = vadd.f32 %v1073, %v1091
        %v1108 = vadd.f32 %v1074, %v1092
        %v1109 = vadd.f32 %v1075, %v1093
        %v1110 = vadd.f32 %v1076, %v1094
        %v1111 = vadd.f32 %v1077, %v1095
        %v1112 = vadd.f32 %v1078, %v1096
        %v1113 = vadd.f32 %v1079, %v1097
        %v1114 = vadd.f32 %v1080, %v1098
        %v1115 = vadd.f32 %v1081, %v1099
        %v1116 = vadd.f32 %v1082, %v1100
        %v1117 = vadd.f32 %v1083, %v1101
        %v1118 = vadd.f32 %v1084, %v1102
        %v1119 = vadd.f32 %v1085, %v1103
        %v1120 = vadd.f32 %v1086, %v1104
        %v1121 = vadd.f32 %v1087, %v1105
        %v1122 = vadd.f32 %v1088, %v1106
        %1123 = vst [vmem:[%s415] sm:$0xff] %v1107
        %1124 = vst [vmem:[%s415 + $0x8] sm:$0xff] %v1108
        %1125 = vst [vmem:[%s415 + $0x10] sm:$0xff] %v1109
        %1126 = vst [vmem:[%s415 + $0x18] sm:$0xff] %v1110
        %1127 = vst [vmem:[%s415 + $0x20] sm:$0xff] %v1111
        %1128 = vst [vmem:[%s415 + $0x28] sm:$0xff] %v1112
        %1129 = vst [vmem:[%s415 + $0x30] sm:$0xff] %v1113
        %1130 = vst [vmem:[%s415 + $0x38] sm:$0xff] %v1114
        %1131 = vst [vmem:[%s415 + $0x40] sm:$0xff] %v1115
        %1132 = vst [vmem:[%s415 + $0x48] sm:$0xff] %v1116
        %1133 = vst [vmem:[%s415 + $0x50] sm:$0xff] %v1117
        %1134 = vst [vmem:[%s415 + $0x58] sm:$0xff] %v1118
        %1135 = vst [vmem:[%s415 + $0x60] sm:$0xff] %v1119
        %1136 = vst [vmem:[%s415 + $0x68] sm:$0xff] %v1120
        %1137 = vst [vmem:[%s415 + $0x70] sm:$0xff] %v1121
        %1138 = vst [vmem:[%s415 + $0x78] sm:$0xff] %v1122
        %s1139 = sand.u32 %s185, 1
        %s1140 = scalar_lea.sflag [#allocation5], %s1139
        %s1141 = sand.u32 %s185, 1
        %s1142 = smul.addr %s1141, 128
        %s1143 = scalar_lea.vmem [#allocation11], %s1142
        %s1144 = sand.u32 %s213, 1
        %s1145 = scalar_lea.sflag [#allocation13], %s1144
        %s1146 = sand.u32 %s213, 1
        %s1147 = smul.addr %s1146, 64
        %s1148 = scalar_lea.vmem [#allocation12], %s1147
        // Predicated region
        $region57: #{tpu_custom_call.1} parent=39 // pred_check
          %p1149 = pneg %p195
        $region58: #{tpu_custom_call.1} parent=39 // pred_check_branch
          %1151 = sbr.rel (%p1149) target = $region60
        $region59: #{tpu_custom_call.1} parent=39 // pred_region
          %s1152 = smul.u32 16, %s39
          %s1154 = ssub.s32 2048, 2048
          %1155 = vsyncadd %s1140, %s1154
          %s1156 = smul.addr %s38, 16
          %s1157 = sadd.s32 %s1152, %s1156
          %s1158 = smul.addr %s1157, 128
          %s1159 = scalar_lea.hbm %s5, %s1158
          %s1160 = sshll.u32 %s1143, 4
          %s1161 = int_to_ptr.vmem [resolvable:$true] %s1160
          %1166 = dma.vmem_to_hbm [thread:$0]  %s1161, 2048, %s1159, %s1140, 128, 128, 8
        $region60: #{tpu_custom_call.1} parent=39 // pred_fallthru
          _
        // Predicated region
        $region61: #{tpu_custom_call.1} parent=39 // pred_check
          %p1167 = pneg %p223
        $region62: #{tpu_custom_call.1} parent=39 // pred_check_branch
          %1169 = sbr.rel (%p1167) target = $region64
        $region63: #{tpu_custom_call.1} parent=39 // pred_region
          %s1170 = smul.u32 16, %s39
          %s1172 = ssub.s32 1024, 1024
          %1173 = vsyncadd %s1145, %s1172
          %s1174 = smul.addr %s38, 16
          %s1175 = sadd.s32 %s1170, %s1174
          %s1176 = smul.addr %s1175, 64
          %s1177 = scalar_lea.hbm %s6, %s1176
          %s1178 = sshll.u32 %s1148, 4
          %s1179 = int_to_ptr.vmem [resolvable:$true] %s1178
          %1184 = dma.vmem_to_hbm [thread:$0]  %s1179, 1024, %s1177, %s1145, 64, 64, 4
        $region64: #{tpu_custom_call.1} parent=39 // pred_fallthru
          _
      $region40: #{tpu_custom_call.1} parent=5 // pred_fallthru
        _
      %p1185 = scmp.le.s32.totalorder 2, %s29
      // Predicated region
      $region65: #{tpu_custom_call.1} parent=5 // pred_check
        %p1186 = pneg %p1185
      $region66: #{tpu_custom_call.1} parent=5 // pred_check_branch
        %1188 = sbr.rel (%p1186) target = $region68
      $region67: #{tpu_custom_call.1} parent=5 // pred_region
        %s1189 = ssub.s32 %s29, 2
        // Predicated region
        $region69: #{tpu_custom_call.1} parent=67 // pred_check
          %p1190 = pneg %p201
        $region70: #{tpu_custom_call.1} parent=67 // pred_check_branch
          %1192 = sbr.rel (%p1190) target = $region72
        $region71: #{tpu_custom_call.1} parent=67 // pred_region
          %s1193 = sand.u32 %s186, 1
          %s1194 = scalar_lea.sflag [#allocation5], %s1193
          %s1195 = sand.u32 %s186, 1
          %s1196 = smul.addr %s1195, 128
          %s1197 = scalar_lea.vmem [#allocation11], %s1196
          %1198 = dma.done %s1194, 2048
        $region72: #{tpu_custom_call.1} parent=67 // pred_fallthru
          _
        // Predicated region
        $region73: #{tpu_custom_call.1} parent=67 // pred_check
          %p1199 = pneg %p229
        $region74: #{tpu_custom_call.1} parent=67 // pred_check_branch
          %1201 = sbr.rel (%p1199) target = $region76
        $region75: #{tpu_custom_call.1} parent=67 // pred_region
          %s1202 = sand.u32 %s214, 1
          %s1203 = scalar_lea.sflag [#allocation13], %s1202
          %s1204 = sand.u32 %s214, 1
          %s1205 = smul.addr %s1204, 64
          %s1206 = scalar_lea.vmem [#allocation12], %s1205
          %1207 = dma.done %s1203, 1024
        $region76: #{tpu_custom_call.1} parent=67 // pred_fallthru
          _
      $region68: #{tpu_custom_call.1} parent=5 // pred_fallthru
        _
    $region6: #{tpu_custom_call.1} parent=1 // loop_footer
      %s33 = sadd.s32 1, %s29
    $region7: #{tpu_custom_call.1} parent=1 // loop_footer_branch
      %28 = sbr.rel target = $region3
    $region8: #{tpu_custom_call.1} parent=1 // loop_exit
      _
    %1208 = vsyncpa [#allocation4], 1
    %s1209 = scalar_lea.sflag [#allocation4], 1
    %1210 = vsyncpa %s1209, 1
    %1211 = vsyncpa [#allocation7], 1
    %s1212 = scalar_lea.sflag [#allocation7], 1
    %1213 = vsyncpa %s1212, 1
    %1214 = vsyncpa [#allocation10], 1
    %s1215 = scalar_lea.sflag [#allocation10], 1
    %1216 = vsyncpa %s1215, 1
    %1217 = vsyncpa [#allocation5], 1
    %s1218 = scalar_lea.sflag [#allocation5], 1
    %1219 = vsyncpa %s1218, 1
    %1220 = vsyncpa [#allocation13], 1
    %s1221 = scalar_lea.sflag [#allocation13], 1
    %1222 = vsyncpa %s1221, 1

</llo_original>
